<compile_context>
chip_gen: v6e
topology: v6e:2x2x1
jax: 0.10.0
libtpu: 0.0.40
codegen_flags: <defaults>
</compile_context>

<pallas_src>
import jax
import jax.numpy as jnp
import numpy as np
from jax import lax
from jax.experimental import pallas as pl
from jax.experimental.pallas import tpu as pltpu

EPS = 1e-6
BIG_NEG = -1e30   # finite "-inf" used to mask padded K columns


# ------------------------------ helpers ----------------------------------- #

def _round_up(x, m):
    return (x + m - 1) // m * m


def _vmem_limit_bytes():
    """Scoped-VMEM limit scaled to the chip generation:
    v5e/v6e (128 MiB physical) -> ~96 MiB, v7x (64 MiB) -> ~48 MiB."""
    try:
        cap = int(pltpu.get_tpu_info().vmem_capacity_bytes)
    except Exception:
        cap = 64 * 1024 * 1024
    return max(32 * 1024 * 1024, (cap * 3) // 4)


def _choose_tile_m(M, K_pad, C_pad, vmem_limit):
    """Largest token tile TM whose live [TM, K_pad] temporaries plus the
    resident fused weights fit comfortably inside the scoped VMEM limit."""
    budget = vmem_limit // 2          # headroom for pipeline buffers/scratch
    tm = 8
    for cand in (512, 256, 128, 64, 32, 16, 8):
        need = 4 * (8 * cand * K_pad          # softmax temporaries (f32)
                    + 4 * C_pad * K_pad       # resident W1/W2 (double-buffered)
                    + 6 * cand * C_pad)       # xd/out tile buffers
        if need <= budget:
            tm = cand
            break
    return min(tm, _round_up(M, 8))


# ----------------------------- Pallas kernel ------------------------------ #

def dgnl_attn_kernel(xd_ref, w1_ref, b1_ref, d1_ref, invd1_ref,
                     d2_ref, invd2_ref, kmask_ref, w2_ref, bz_ref, out_ref):
    # per (batch, M-tile) block; leading dim of size 1 on batched refs
    xd = xd_ref[0]                                                # [TM, Cp]

    # fused theta/phi 1x1 convs: logits = xd @ (Wt^T @ phi) + b_theta @ phi
    # (b1 already carries BIG_NEG on padded K columns)
    logits = jnp.dot(xd, w1_ref[0],
                     preferred_element_type=jnp.float32) + b1_ref[0]  # [TM, Kp]
    m = jnp.max(logits, axis=-1, keepdims=True)
    ra = jnp.exp(logits - m)
    ra = ra * pl.reciprocal(jnp.sum(ra, axis=-1, keepdims=True), approx=False)

    # depth-guided affinity with precomputed reciprocals (no [TM,K] divides)
    kmask = kmask_ref[...]                                        # [1, Kp]
    rd_raw = jnp.minimum(d1_ref[0] * invd2_ref[0],
                         d2_ref[0] * invd1_ref[0]) + kmask        # [TM, Kp]
    mrd = jnp.max(rd_raw, axis=-1, keepdims=True)
    rd = jnp.exp(rd_raw - mrd)
    rd = rd * pl.reciprocal(jnp.sum(rd, axis=-1, keepdims=True), approx=False)

    # final softmax: ra*rd in (0, 1], safe without the max shift;
    # kmask keeps padded K columns at exactly zero probability.
    e = jnp.exp(ra * rd + kmask)
    s = e * pl.reciprocal(jnp.sum(e, axis=-1, keepdims=True), approx=False)

    # fused g/z 1x1 convs: out = S @ (g @ Wz^T) + b_z
    out = jnp.dot(s, w2_ref[0],
                  preferred_element_type=jnp.float32) + bz_ref[...]   # [TM, Cp]
    out_ref[0] = out.astype(out_ref.dtype)


def dgnl_attention_pallas(xd_flat, w_theta, b_theta, phi, g, d1, d2, w_z, b_z):
    """xd_flat [n,M,C], phi [n,C2,K], g [n,K,C2], d1 [n,M,1], d2 [n,1,K],
    w_theta [C2,C], w_z [C,C2]. Returns z-conv output tokens [n,M,C]."""
    n, M, C = xd_flat.shape
    K = phi.shape[2]
    f32 = jnp.float32

    # --- algebraic fusion of the theta/z 1x1 convs into attention operands --
    w1 = jnp.einsum('co,nok->nck', w_theta.T.astype(f32), phi.astype(f32))  # [n,C,K]
    b1 = jnp.einsum('o,nok->nk', b_theta.astype(f32), phi.astype(f32))      # [n,K]
    w2 = jnp.einsum('nko,oc->nkc', g.astype(f32), w_z.T.astype(f32))        # [n,K,C]

    # --- pad to lane-dense shapes and pick the M tile -----------------------
    C_pad = _round_up(C, 128)
    K_pad = _round_up(K, 128)
    vmem_limit = _vmem_limit_bytes()
    TM = _choose_tile_m(M, K_pad, C_pad, vmem_limit)
    M_pad = _round_up(M, TM)

    xd_p = jnp.zeros((n, M_pad, C_pad), f32).at[:, :M, :C].set(xd_flat.astype(f32))
    w1_p = jnp.zeros((n, C_pad, K_pad), f32).at[:, :C, :K].set(w1)
    b1_p = jnp.full((n, 1, K_pad), BIG_NEG, f32).at[:, :, :K].set(b1[:, None, :])
    w2_p = jnp.zeros((n, K_pad, C_pad), f32).at[:, :K, :C].set(w2)
    bz_p = jnp.zeros((1, C_pad), f32).at[:, :C].set(b_z.astype(f32)[None, :])

    d1_p = jnp.zeros((n, M_pad, 1), f32).at[:, :M, :].set(d1.astype(f32))
    d2_p = jnp.zeros((n, 1, K_pad), f32).at[:, :, :K].set(d2.astype(f32))
    invd1_p = 1.0 / (d1_p + EPS)
    invd2_p = 1.0 / (d2_p + EPS)
    kmask = jnp.full((1, K_pad), BIG_NEG, f32).at[:, :K].set(0.0)

    grid = (n, M_pad // TM)
    out_p = pl.pallas_call(
        dgnl_attn_kernel,
        out_shape=jax.ShapeDtypeStruct((n, M_pad, C_pad), f32),
        grid=grid,
        in_specs=[
            pl.BlockSpec((1, TM, C_pad), lambda b, m: (b, m, 0)),      # xd tile
            pl.BlockSpec((1, C_pad, K_pad), lambda b, m: (b, 0, 0)),   # W1 (resident over m)
            pl.BlockSpec((1, 1, K_pad), lambda b, m: (b, 0, 0)),       # b1 (+K mask)
            pl.BlockSpec((1, TM, 1), lambda b, m: (b, m, 0)),          # depth1 tile
            pl.BlockSpec((1, TM, 1), lambda b, m: (b, m, 0)),          # 1/(depth1+eps)
            pl.BlockSpec((1, 1, K_pad), lambda b, m: (b, 0, 0)),       # depth2 row
            pl.BlockSpec((1, 1, K_pad), lambda b, m: (b, 0, 0)),       # 1/(depth2+eps)
            pl.BlockSpec((1, K_pad), lambda b, m: (0, 0)),             # K pad mask
            pl.BlockSpec((1, K_pad, C_pad), lambda b, m: (b, 0, 0)),   # W2 (resident over m)
            pl.BlockSpec((1, C_pad), lambda b, m: (0, 0)),             # b_z
        ],
        out_specs=pl.BlockSpec((1, TM, C_pad), lambda b, m: (b, m, 0)),
        compiler_params=pltpu.CompilerParams(
            dimension_semantics=("parallel", "parallel"),
            vmem_limit_bytes=int(vmem_limit)),
    )(xd_p, w1_p, b1_p, d1_p, invd1_p, d2_p, invd2_p, kmask, w2_p, bz_p)

    return out_p[:, :M, :C]


def dgnl_attention_reference(xd_flat, w_theta, b_theta, phi, g, d1, d2, w_z, b_z):
    theta = jnp.einsum('nmc,oc->nmo', xd_flat, w_theta) + b_theta
    ra = jax.nn.softmax(jnp.einsum('nmo,nok->nmk', theta, phi), axis=-1)
    rd = jnp.minimum(d1 / (d2 + EPS), d2 / (d1 + EPS))
    rd = jax.nn.softmax(rd, axis=-1)
    s = jax.nn.softmax(ra * rd, axis=-1)
    y = jnp.einsum('nmk,nko->nmo', s, g)
    return jnp.einsum('nmo,co->nmc', y, w_z) + b_z


# ------------------------------- JAX glue ---------------------------------- #

def conv1x1(x_nchw, w, b):
    # w: [out, in], b: [out]; matches nn.Conv2d(in, out, kernel_size=1)
    out = jnp.einsum('oc,nchw->nohw', w, x_nchw)
    return out + b[None, :, None, None]


def depthwise_down4(x_nchw):
    # matches nn.Conv2d(c, c, 4, stride=4, groups=c, bias=False), weights 1/16
    n, c, h, w = x_nchw.shape
    wgt = jnp.full((c, 1, 4, 4), 1.0 / 16, dtype=x_nchw.dtype)
    return lax.conv_general_dilated(
        x_nchw, wgt, window_strides=(4, 4), padding='VALID',
        dimension_numbers=('NCHW', 'OIHW', 'NCHW'), feature_group_count=c)


def maxpool2(x_nchw):
    return lax.reduce_window(x_nchw, -jnp.inf, lax.max,
                             window_dimensions=(1, 1, 2, 2),
                             window_strides=(1, 1, 2, 2),
                             padding='VALID')


def bilinear_align_corners(x_nchw, out_h, out_w):
    # matches F.interpolate(..., mode='bilinear', align_corners=True)
    n, c, h, w = x_nchw.shape
    if out_h == 1:
        ys = jnp.zeros((1,), dtype=jnp.float32)
    else:
        ys = jnp.arange(out_h, dtype=jnp.float32) * ((h - 1) / (out_h - 1))
    if out_w == 1:
        xs = jnp.zeros((1,), dtype=jnp.float32)
    else:
        xs = jnp.arange(out_w, dtype=jnp.float32) * ((w - 1) / (out_w - 1))
    y0 = jnp.floor(ys).astype(jnp.int32)
    y1 = jnp.minimum(y0 + 1, h - 1)
    wy = (ys - y0.astype(jnp.float32))[None, None, :, None]
    x0 = jnp.floor(xs).astype(jnp.int32)
    x1 = jnp.minimum(x0 + 1, w - 1)
    wx = (xs - x0.astype(jnp.float32))[None, None, None, :]
    g00 = x_nchw[:, :, y0][:, :, :, x0]
    g01 = x_nchw[:, :, y0][:, :, :, x1]
    g10 = x_nchw[:, :, y1][:, :, :, x0]
    g11 = x_nchw[:, :, y1][:, :, :, x1]
    top = g00 * (1.0 - wx) + g01 * wx
    bot = g10 * (1.0 - wx) + g11 * wx
    return top * (1.0 - wy) + bot * wy


def dgnl_forward(params, x, depth_map, use_pallas=True):
    n, c, h, w = x.shape
    c2 = c // 2
    h4, w4 = h // 4, w // 4
    h8, w8 = h // 8, w // 8
    M, K = h4 * w4, h8 * w8

    x_down = depthwise_down4(x)                                        # [n,c,h4,w4]

    phi = maxpool2(conv1x1(x_down, params['w_phi'], params['b_phi']))  # [n,c2,h8,w8]
    phi = phi.reshape(n, c2, K)
    gmat = maxpool2(conv1x1(x_down, params['w_g'], params['b_g']))
    gmat = gmat.reshape(n, c2, K).transpose(0, 2, 1)                   # [n,K,c2]

    xd_flat = x_down.reshape(n, c, M).transpose(0, 2, 1)               # [n,M,c]

    depth1 = bilinear_align_corners(depth_map, h4, w4)
    depth1 = depth1.reshape(n, 1, M).transpose(0, 2, 1)                # [n,M,1]
    depth2 = bilinear_align_corners(depth_map, h8, w8).reshape(n, 1, K)  # [n,1,K]

    attn = dgnl_attention_pallas if use_pallas else dgnl_attention_reference
    z_out = attn(xd_flat, params['w_theta'], params['b_theta'],
                 phi, gmat, depth1, depth2,
                 params['w_z'], params['b_z'])                         # [n,M,c]

    z_map = z_out.transpose(0, 2, 1).reshape(n, c, h4, w4)
    # F.upsample(..., mode='bilinear', align_corners=True) back to (h, w)
    return x + bilinear_align_corners(z_map, h, w)


def init_params(key, c):
    c2 = c // 2
    ks = jax.random.split(key, 8)
    scale = 0.1
    return {
        'w_theta': scale * jax.random.normal(ks[0], (c2, c), jnp.float32),
        'b_theta': scale * jax.random.normal(ks[1], (c2,), jnp.float32),
        'w_phi':   scale * jax.random.normal(ks[2], (c2, c), jnp.float32),
        'b_phi':   scale * jax.random.normal(ks[3], (c2,), jnp.float32),
        'w_g':     scale * jax.random.normal(ks[4], (c2, c), jnp.float32),
        'b_g':     scale * jax.random.normal(ks[5], (c2,), jnp.float32),
        'w_z':     scale * jax.random.normal(ks[6], (c, c2), jnp.float32),
        'b_z':     scale * jax.random.normal(ks[7], (c,), jnp.float32),
    }
    # NOTE: self.sigma_pow2 is defined but unused in the original forward.


if __name__ == "__main__":
    key = jax.random.PRNGKey(0)
    k_x, k_d, k_p = jax.random.split(key, 3)

    n, c, h, w = 2, 8, 32, 32
    x = jax.random.normal(k_x, (n, c, h, w), jnp.float32)
    depth_map = jax.random.uniform(k_d, (n, 1, h, w), jnp.float32,
                                   minval=0.1, maxval=1.0)
    params = init_params(k_p, c)

    out = dgnl_forward(params, x, depth_map, use_pallas=True)
    out = jax.block_until_ready(out)

    out_ref = dgnl_forward(params, x, depth_map, use_pallas=False)
    out_ref = jax.block_until_ready(out_ref)

    np.testing.assert_allclose(np.asarray(out), np.asarray(out_ref),
                               rtol=1e-4, atol=1e-4)
    assert out.shape == (n, c, h, w)
    print("KERNEL_OK")
</pallas_src>

<mosaic_0001>
module attributes {stable_mosaic.version = 11 : i64} {
  func.func @dgnl_attn_kernel(%arg0: i32, %arg1: i32, %arg2: memref<1x64x128xf32, #tpu.memory_space<vmem>>, %arg3: memref<1x128x128xf32, #tpu.memory_space<vmem>>, %arg4: memref<1x1x128xf32, #tpu.memory_space<vmem>>, %arg5: memref<1x64x1xf32, #tpu.memory_space<vmem>>, %arg6: memref<1x64x1xf32, #tpu.memory_space<vmem>>, %arg7: memref<1x1x128xf32, #tpu.memory_space<vmem>>, %arg8: memref<1x1x128xf32, #tpu.memory_space<vmem>>, %arg9: memref<1x128xf32, #tpu.memory_space<vmem>>, %arg10: memref<1x128x128xf32, #tpu.memory_space<vmem>>, %arg11: memref<1x128xf32, #tpu.memory_space<vmem>>, %arg12: memref<1x64x128xf32, #tpu.memory_space<vmem>>) attributes {dimension_semantics = [#tpu.dimension_semantics<parallel>, #tpu.dimension_semantics<parallel>], iteration_bounds = array<i64: 2, 1>, scalar_prefetch = 0 : i64, scratch_operands = 0 : i64, tpu.core_type = #tpu.core_type<tc>, window_params = [{transform_indices = @transform_0, window_bounds = array<i64: 1, 64, 128>}, {transform_indices = @transform_1, window_bounds = array<i64: 1, 128, 128>}, {transform_indices = @transform_2, window_bounds = array<i64: 1, 1, 128>}, {transform_indices = @transform_3, window_bounds = array<i64: 1, 64, 1>}, {transform_indices = @transform_4, window_bounds = array<i64: 1, 64, 1>}, {transform_indices = @transform_5, window_bounds = array<i64: 1, 1, 128>}, {transform_indices = @transform_6, window_bounds = array<i64: 1, 1, 128>}, {pipeline_mode = #tpu.pipeline_mode<synchronous>, transform_indices = @transform_7, window_bounds = array<i64: 1, 128>}, {transform_indices = @transform_8, window_bounds = array<i64: 1, 128, 128>}, {pipeline_mode = #tpu.pipeline_mode<synchronous>, transform_indices = @transform_9, window_bounds = array<i64: 1, 128>}, {transform_indices = @transform_10, window_bounds = array<i64: 1, 64, 128>}]} {
    %c0 = arith.constant 0 : index
    %c0_0 = arith.constant 0 : index
    %c0_1 = arith.constant 0 : index
    %0 = vector.load %arg2[%c0, %c0_0, %c0_1] : memref<1x64x128xf32, #tpu.memory_space<vmem>>, vector<1x64x128xf32>
    %1 = vector.shape_cast %0 : vector<1x64x128xf32> to vector<64x128xf32>
    %c0_2 = arith.constant 0 : index
    %c0_3 = arith.constant 0 : index
    %c0_4 = arith.constant 0 : index
    %2 = vector.load %arg3[%c0_2, %c0_3, %c0_4] : memref<1x128x128xf32, #tpu.memory_space<vmem>>, vector<1x128x128xf32>
    %3 = vector.shape_cast %2 : vector<1x128x128xf32> to vector<128x128xf32>
    %cst = arith.constant dense<0.000000e+00> : vector<64x128xf32>
    %4 = tpu.matmul %1, %3, %cst {dimension_numbers = #tpu.dot_dimension_numbers<[1], [0], [0], [1], [0, 0, 1, 1], [], []>} : vector<64x128xf32>, vector<128x128xf32>, vector<64x128xf32> -> vector<64x128xf32>
    %c0_5 = arith.constant 0 : index
    %c0_6 = arith.constant 0 : index
    %c0_7 = arith.constant 0 : index
    %5 = vector.load %arg4[%c0_5, %c0_6, %c0_7] : memref<1x1x128xf32, #tpu.memory_space<vmem>>, vector<1x1x128xf32>
    %6 = vector.shape_cast %5 : vector<1x1x128xf32> to vector<1x128xf32>
    %7 = vector.broadcast %6 : vector<1x128xf32> to vector<64x128xf32>
    %8 = arith.addf %4, %7 : vector<64x128xf32>
    %cst_8 = arith.constant dense<0xFF800000> : vector<64xf32>
    %9 = vector.multi_reduction <maximumf>, %8, %cst_8 [1] : vector<64x128xf32> to vector<64xf32>
    %10 = vector.shape_cast %9 : vector<64xf32> to vector<64x1xf32>
    %11 = vector.broadcast %10 : vector<64x1xf32> to vector<64x128xf32>
    %12 = arith.subf %8, %11 : vector<64x128xf32>
    %13 = math.exp %12 : vector<64x128xf32>
    %cst_9 = arith.constant dense<0.000000e+00> : vector<64xf32>
    %14 = vector.multi_reduction <add>, %13, %cst_9 [1] : vector<64x128xf32> to vector<64xf32>
    %15 = vector.shape_cast %14 : vector<64xf32> to vector<64x1xf32>
    %16 = tpu.reciprocal %15 : vector<64x1xf32> -> vector<64x1xf32>
    %17 = vector.broadcast %16 : vector<64x1xf32> to vector<64x128xf32>
    %18 = arith.mulf %13, %17 : vector<64x128xf32>
    %c0_10 = arith.constant 0 : index
    %c0_11 = arith.constant 0 : index
    %19 = vector.load %arg9[%c0_10, %c0_11] : memref<1x128xf32, #tpu.memory_space<vmem>>, vector<1x128xf32>
    %c0_12 = arith.constant 0 : index
    %c0_13 = arith.constant 0 : index
    %c0_14 = arith.constant 0 : index
    %20 = vector.load %arg5[%c0_12, %c0_13, %c0_14] : memref<1x64x1xf32, #tpu.memory_space<vmem>>, vector<1x64x1xf32>
    %21 = vector.shape_cast %20 : vector<1x64x1xf32> to vector<64x1xf32>
    %c0_15 = arith.constant 0 : index
    %c0_16 = arith.constant 0 : index
    %c0_17 = arith.constant 0 : index
    %22 = vector.load %arg8[%c0_15, %c0_16, %c0_17] : memref<1x1x128xf32, #tpu.memory_space<vmem>>, vector<1x1x128xf32>
    %23 = vector.shape_cast %22 : vector<1x1x128xf32> to vector<1x128xf32>
    %24 = vector.broadcast %21 : vector<64x1xf32> to vector<64x128xf32>
    %25 = vector.broadcast %23 : vector<1x128xf32> to vector<64x128xf32>
    %26 = arith.mulf %24, %25 : vector<64x128xf32>
    %c0_18 = arith.constant 0 : index
    %c0_19 = arith.constant 0 : index
    %c0_20 = arith.constant 0 : index
    %27 = vector.load %arg7[%c0_18, %c0_19, %c0_20] : memref<1x1x128xf32, #tpu.memory_space<vmem>>, vector<1x1x128xf32>
    %28 = vector.shape_cast %27 : vector<1x1x128xf32> to vector<1x128xf32>
    %c0_21 = arith.constant 0 : index
    %c0_22 = arith.constant 0 : index
    %c0_23 = arith.constant 0 : index
    %29 = vector.load %arg6[%c0_21, %c0_22, %c0_23] : memref<1x64x1xf32, #tpu.memory_space<vmem>>, vector<1x64x1xf32>
    %30 = vector.shape_cast %29 : vector<1x64x1xf32> to vector<64x1xf32>
    %31 = vector.broadcast %28 : vector<1x128xf32> to vector<64x128xf32>
    %32 = vector.broadcast %30 : vector<64x1xf32> to vector<64x128xf32>
    %33 = arith.mulf %31, %32 : vector<64x128xf32>
    %34 = arith.minimumf %26, %33 : vector<64x128xf32>
    %35 = vector.broadcast %19 : vector<1x128xf32> to vector<64x128xf32>
    %36 = arith.addf %34, %35 : vector<64x128xf32>
    %cst_24 = arith.constant dense<0xFF800000> : vector<64xf32>
    %37 = vector.multi_reduction <maximumf>, %36, %cst_24 [1] : vector<64x128xf32> to vector<64xf32>
    %38 = vector.shape_cast %37 : vector<64xf32> to vector<64x1xf32>
    %39 = vector.broadcast %38 : vector<64x1xf32> to vector<64x128xf32>
    %40 = arith.subf %36, %39 : vector<64x128xf32>
    %41 = math.exp %40 : vector<64x128xf32>
    %cst_25 = arith.constant dense<0.000000e+00> : vector<64xf32>
    %42 = vector.multi_reduction <add>, %41, %cst_25 [1] : vector<64x128xf32> to vector<64xf32>
    %43 = vector.shape_cast %42 : vector<64xf32> to vector<64x1xf32>
    %44 = tpu.reciprocal %43 : vector<64x1xf32> -> vector<64x1xf32>
    %45 = vector.broadcast %44 : vector<64x1xf32> to vector<64x128xf32>
    %46 = arith.mulf %41, %45 : vector<64x128xf32>
    %47 = arith.mulf %18, %46 : vector<64x128xf32>
    %48 = vector.broadcast %19 : vector<1x128xf32> to vector<64x128xf32>
    %49 = arith.addf %47, %48 : vector<64x128xf32>
    %50 = math.exp %49 : vector<64x128xf32>
    %cst_26 = arith.constant dense<0.000000e+00> : vector<64xf32>
    %51 = vector.multi_reduction <add>, %50, %cst_26 [1] : vector<64x128xf32> to vector<64xf32>
    %52 = vector.shape_cast %51 : vector<64xf32> to vector<64x1xf32>
    %53 = tpu.reciprocal %52 : vector<64x1xf32> -> vector<64x1xf32>
    %54 = vector.broadcast %53 : vector<64x1xf32> to vector<64x128xf32>
    %55 = arith.mulf %50, %54 : vector<64x128xf32>
    %c0_27 = arith.constant 0 : index
    %c0_28 = arith.constant 0 : index
    %c0_29 = arith.constant 0 : index
    %56 = vector.load %arg10[%c0_27, %c0_28, %c0_29] : memref<1x128x128xf32, #tpu.memory_space<vmem>>, vector<1x128x128xf32>
    %57 = vector.shape_cast %56 : vector<1x128x128xf32> to vector<128x128xf32>
    %cst_30 = arith.constant dense<0.000000e+00> : vector<64x128xf32>
    %58 = tpu.matmul %55, %57, %cst_30 {dimension_numbers = #tpu.dot_dimension_numbers<[1], [0], [0], [1], [0, 0, 1, 1], [], []>} : vector<64x128xf32>, vector<128x128xf32>, vector<64x128xf32> -> vector<64x128xf32>
    %c0_31 = arith.constant 0 : index
    %c0_32 = arith.constant 0 : index
    %59 = vector.load %arg11[%c0_31, %c0_32] : memref<1x128xf32, #tpu.memory_space<vmem>>, vector<1x128xf32>
    %60 = vector.broadcast %59 : vector<1x128xf32> to vector<64x128xf32>
    %61 = arith.addf %58, %60 : vector<64x128xf32>
    %c0_33 = arith.constant 0 : index
    %c0_34 = arith.constant 0 : index
    %c0_35 = arith.constant 0 : index
    %62 = vector.load %arg12[%c0_33, %c0_34, %c0_35] : memref<1x64x128xf32, #tpu.memory_space<vmem>>, vector<1x64x128xf32>
    %63 = vector.shape_cast %62 : vector<1x64x128xf32> to vector<64x128xf32>
    %64 = vector.shape_cast %61 : vector<64x128xf32> to vector<1x64x128xf32>
    tpu.vector_store %arg12[%c0_33, %c0_34, %c0_35], %64 {strides = array<i32>} : memref<1x64x128xf32, #tpu.memory_space<vmem>>, vector<1x64x128xf32>,
    return
  }
  func.func @transform_0(%arg0: i32, %arg1: i32) -> (i32, i32, i32) {
    %c0_i32 = arith.constant 0 : i32
    %c0_i32_0 = arith.constant 0 : i32
    return %arg0, %arg1, %c0_i32 : i32, i32, i32
  }
  func.func @transform_1(%arg0: i32, %arg1: i32) -> (i32, i32, i32) {
    %c0_i32 = arith.constant 0 : i32
    %c0_i32_0 = arith.constant 0 : i32
    %c0_i32_1 = arith.constant 0 : i32
    return %arg0, %c0_i32, %c0_i32_0 : i32, i32, i32
  }
  func.func @transform_2(%arg0: i32, %arg1: i32) -> (i32, i32, i32) {
    %c0_i32 = arith.constant 0 : i32
    %c0_i32_0 = arith.constant 0 : i32
    %c0_i32_1 = arith.constant 0 : i32
    return %arg0, %c0_i32, %c0_i32_0 : i32, i32, i32
  }
  func.func @transform_3(%arg0: i32, %arg1: i32) -> (i32, i32, i32) {
    %c0_i32 = arith.constant 0 : i32
    %c0_i32_0 = arith.constant 0 : i32
    return %arg0, %arg1, %c0_i32 : i32, i32, i32
  }
  func.func @transform_4(%arg0: i32, %arg1: i32) -> (i32, i32, i32) {
    %c0_i32 = arith.constant 0 : i32
    %c0_i32_0 = arith.constant 0 : i32
    return %arg0, %arg1, %c0_i32 : i32, i32, i32
  }
  func.func @transform_5(%arg0: i32, %arg1: i32) -> (i32, i32, i32) {
    %c0_i32 = arith.constant 0 : i32
    %c0_i32_0 = arith.constant 0 : i32
    %c0_i32_1 = arith.constant 0 : i32
    return %arg0, %c0_i32, %c0_i32_0 : i32, i32, i32
  }
  func.func @transform_6(%arg0: i32, %arg1: i32) -> (i32, i32, i32) {
    %c0_i32 = arith.constant 0 : i32
    %c0_i32_0 = arith.constant 0 : i32
    %c0_i32_1 = arith.constant 0 : i32
    return %arg0, %c0_i32, %c0_i32_0 : i32, i32, i32
  }
  func.func @transform_7(%arg0: i32, %arg1: i32) -> (i32, i32) {
    %c0_i32 = arith.constant 0 : i32
    %c0_i32_0 = arith.constant 0 : i32
    %c0_i32_1 = arith.constant 0 : i32
    return %c0_i32, %c0_i32_0 : i32, i32
  }
  func.func @transform_8(%arg0: i32, %arg1: i32) -> (i32, i32, i32) {
    %c0_i32 = arith.constant 0 : i32
    %c0_i32_0 = arith.constant 0 : i32
    %c0_i32_1 = arith.constant 0 : i32
    return %arg0, %c0_i32, %c0_i32_0 : i32, i32, i32
  }
  func.func @transform_9(%arg0: i32, %arg1: i32) -> (i32, i32) {
    %c0_i32 = arith.constant 0 : i32
    %c0_i32_0 = arith.constant 0 : i32
    %c0_i32_1 = arith.constant 0 : i32
    return %c0_i32, %c0_i32_0 : i32, i32
  }
  func.func @transform_10(%arg0: i32, %arg1: i32) -> (i32, i32, i32) {
    %c0_i32 = arith.constant 0 : i32
    %c0_i32_0 = arith.constant 0 : i32
    return %arg0, %arg1, %c0_i32 : i32, i32, i32
  }
}

</mosaic_0001>

<llo_original>
// kernel: tpu_custom_call.1
$region0: #{tpu_custom_call.1}
  #allocation0 [shape = 'u32[]', space=smem, size = 0x4, offset = 0x4, fixed_abs, tag = 'smem constant byte address 0x4 - core index']
  #allocation1 [shape = 'u32[144,128]{1,0:T(1,128)}', space=vmem, size = 0x12000, scoped, tag = 'internal scratch']
  %s0 = inlined_call_operand.hbm [shape: f32[2,64,128], index: 0, kind: input, shape index: {}]
  %s1 = inlined_call_operand.vmem [shape: f32[2,128,128], index: 1, kind: input, shape index: {}]
  %s2 = inlined_call_operand.vmem [shape: f32[2,1,128], index: 2, kind: input, shape index: {}]
  %s3 = inlined_call_operand.vmem [shape: f32[2,64,1], index: 3, kind: input, shape index: {}]
  %s4 = inlined_call_operand.vmem [shape: f32[2,64,1], index: 4, kind: input, shape index: {}]
  %s5 = inlined_call_operand.vmem [shape: f32[2,1,128], index: 5, kind: input, shape index: {}]
  %s6 = inlined_call_operand.vmem [shape: f32[2,1,128], index: 6, kind: input, shape index: {}]
  %s7 = inlined_call_operand.vmem [shape: f32[1,128], index: 7, kind: input, shape index: {}]
  %s8 = inlined_call_operand.hbm [shape: f32[2,128,128], index: 8, kind: input, shape index: {}]
  %s9 = inlined_call_operand.vmem [shape: f32[1,128], index: 9, kind: input, shape index: {}]
  %s10 = inlined_call_operand.hbm [shape: f32[2,64,128], index: 10, kind: output, shape index: {}]
  %s11 = sld [smem:[#allocation0]]
  $region81: #{tpu_custom_call.1} parent=0
    _
  %s13 = ssub.s32 1, %s11
  %s14 = scalar_select 0, %s13, %s11
  $region1: #{tpu_custom_call.1} parent=0
    #allocation2 [shape = 'u8[65536]{0}', space=vmem, size = 0x10000, scoped, tag = 'input window, operand 0']
    #allocation3 [shape = 's32[2]{0}', space=sflag, size = 0x8, scoped, tag = 'scoped memory for tpu_custom_call.1']
    #allocation4 [shape = 's32[2]{0}', space=sflag, size = 0x8, scoped, tag = 'scoped memory for tpu_custom_call.1']
    #allocation5 [shape = 'u8[131072]{0}', space=vmem, size = 0x20000, scoped, tag = 'input window, operand 8']
    #allocation6 [shape = 's32[2]{0}', space=sflag, size = 0x8, scoped, tag = 'scoped memory for tpu_custom_call.1']
    #allocation7 [shape = 'u8[65536]{0}', space=vmem, size = 0x10000, scoped, tag = 'output window, operand 0']
    %15 = vsyncpa [#allocation3], 0
    %s16 = scalar_lea.sflag [#allocation3], 1
    %17 = vsyncpa %s16, 0
    %18 = vsyncpa [#allocation6], 0
    %s19 = scalar_lea.sflag [#allocation6], 1
    %20 = vsyncpa %s19, 0
    %21 = vsyncpa [#allocation4], 0
    %s22 = scalar_lea.sflag [#allocation4], 1
    %23 = vsyncpa %s22, 0
    loop: start=0, step=1, limit=4
    $region2: #{tpu_custom_call.1} parent=1 // loop_pre_header
      _
    $region3: #{tpu_custom_call.1} parent=1 // loop_header
      %s25 = sphi 0, %s29
      %p26 = scmp.ge.s32.totalorder %s25, 4
      %s32 = sphi 0, %s44
      %s33 = sphi 0, %s40
      %s34 = sphi 0, %s32
      %s35 = sphi 0, %s33
      %s36 = sphi 0, %s34
      %s37 = sphi 0, %s35
      %s49 = sphi 0, %s51
      %s52 = sphi 0, %s49
      %s53 = sphi 0, %s52
      %s69 = sphi 0, %s53
      %s75 = sphi 0, %s77
      %s78 = sphi 0, %s75
      %s79 = sphi 0, %s78
      %s95 = sphi 0, %s79
      %s101 = sphi 0, %s103
      %s104 = sphi 0, %s101
      %s105 = sphi 0, %s104
      %s121 = sphi 0, %s105
      %s129 = sphi 0, %s131
      %s132 = sphi 0, %s129
      %s133 = sphi 0, %s132
      %s149 = sphi 0, %s133
      %s157 = sphi 0, %s159
      %s160 = sphi 0, %s157
      %s161 = sphi 0, %s160
      %s177 = sphi 0, %s161
      %s183 = sphi 0, %s185
      %s186 = sphi 0, %s183
      %s187 = sphi 0, %s186
      %s203 = sphi 0, %s187
      %s209 = sphi 0, %s211
      %s212 = sphi 0, %s209
      %s213 = sphi 0, %s212
      %s229 = sphi 0, %s213
      %s233 = sphi 0, %s233
      %s235 = sphi 0, %s233
      %s236 = sphi 0, %s235
      %s250 = sphi 0, %s236
      %s256 = sphi 0, %s258
      %s259 = sphi 0, %s256
      %s260 = sphi 0, %s259
      %s276 = sphi 0, %s260
      %s280 = sphi 0, %s280
      %s282 = sphi 0, %s280
      %s283 = sphi 0, %s282
      %s297 = sphi 0, %s283
      %s305 = sphi 0, %s307
      %s308 = sphi 0, %s305
      %s309 = sphi 0, %s308
      %s325 = sphi 0, %s309
    $region4: #{tpu_custom_call.1} parent=1 // loop_header_branch
      %28 = sbr.rel (%p26) target = $region8
    $region5: #{tpu_custom_call.1} parent=1 // loop_body
      %s30 = ssub.s32 %s25, 1
      %s31 = ssub.s32 %s25, 2
      %s38 = sadd.s32 1, %s33
      %p39 = scmp.ge.s32.totalorder %s38, 1
      %s40 = scalar_select %p39, 0, %s38
      %s41 = sadd.s32 1, %s32
      %s42 = scalar_select %p39, %s41, %s32
      %p43 = scmp.ge.s32.totalorder %s42, 2
      %s44 = scalar_select %p43, 0, %s42
      %s45 = ssub.s32 %s32, %s44
      %s46 = ssub.s32 %s33, %s40
      %s47 = sor.u32 %s45, %s46
      %p48 = scmp.eq.s32.totalorder %s47, 0
      %s50 = sadd.s32 %s49, 1
      %s51 = scalar_select %p48, %s49, %s50
      %p54 = pneg %p48
      %p55 = scmp.eq.s32.totalorder %s25, 1
      %p56 = por %p54, %p55
      %p57 = scmp.ne.s32.totalorder %s49, %s52
      %p58 = scmp.eq.s32.totalorder %s25, 0
      %p59 = por %p57, %p58
      %p60 = scmp.ne.s32.totalorder %s49, %s52
      %p61 = scmp.eq.s32.totalorder %s30, 1
      %p62 = por %p60, %p61
      %p63 = scmp.ne.s32.totalorder %s52, %s53
      %p64 = scmp.eq.s32.totalorder %s30, 0
      %p65 = por %p63, %p64
      %p66 = scmp.ne.s32.totalorder %s52, %s53
      %p67 = scmp.eq.s32.totalorder %s31, 1
      %p68 = por %p66, %p67
      %p70 = scmp.ne.s32.totalorder %s53, %s69
      %p71 = scmp.eq.s32.totalorder %s31, 0
      %p72 = por %p70, %p71
      %s73 = ssub.s32 %s32, %s44
      %p74 = scmp.eq.s32.totalorder %s73, 0
      %s76 = sadd.s32 %s75, 1
      %s77 = scalar_select %p74, %s75, %s76
      %p80 = pneg %p74
      %p81 = scmp.eq.s32.totalorder %s25, 1
      %p82 = por %p80, %p81
      %p83 = scmp.ne.s32.totalorder %s75, %s78
      %p84 = scmp.eq.s32.totalorder %s25, 0
      %p85 = por %p83, %p84
      %p86 = scmp.ne.s32.totalorder %s75, %s78
      %p87 = scmp.eq.s32.totalorder %s30, 1
      %p88 = por %p86, %p87
      %p89 = scmp.ne.s32.totalorder %s78, %s79
      %p90 = scmp.eq.s32.totalorder %s30, 0
      %p91 = por %p89, %p90
      %p92 = scmp.ne.s32.totalorder %s78, %s79
      %p93 = scmp.eq.s32.totalorder %s31, 1
      %p94 = por %p92, %p93
      %p96 = scmp.ne.s32.totalorder %s79, %s95
      %p97 = scmp.eq.s32.totalorder %s31, 0
      %p98 = por %p96, %p97
      %s99 = ssub.s32 %s32, %s44
      %p100 = scmp.eq.s32.totalorder %s99, 0
      %s102 = sadd.s32 %s101, 1
      %s103 = scalar_select %p100, %s101, %s102
      %p106 = pneg %p100
      %p107 = scmp.eq.s32.totalorder %s25, 1
      %p108 = por %p106, %p107
      %p109 = scmp.ne.s32.totalorder %s101, %s104
      %p110 = scmp.eq.s32.totalorder %s25, 0
      %p111 = por %p109, %p110
      %p112 = scmp.ne.s32.totalorder %s101, %s104
      %p113 = scmp.eq.s32.totalorder %s30, 1
      %p114 = por %p112, %p113
      %p115 = scmp.ne.s32.totalorder %s104, %s105
      %p116 = scmp.eq.s32.totalorder %s30, 0
      %p117 = por %p115, %p116
      %p118 = scmp.ne.s32.totalorder %s104, %s105
      %p119 = scmp.eq.s32.totalorder %s31, 1
      %p120 = por %p118, %p119
      %p122 = scmp.ne.s32.totalorder %s105, %s121
      %p123 = scmp.eq.s32.totalorder %s31, 0
      %p124 = por %p122, %p123
      %s125 = ssub.s32 %s32, %s44
      %s126 = ssub.s32 %s33, %s40
      %s127 = sor.u32 %s125, %s126
      %p128 = scmp.eq.s32.totalorder %s127, 0
      %s130 = sadd.s32 %s129, 1
      %s131 = scalar_select %p128, %s129, %s130
      %p134 = pneg %p128
      %p135 = scmp.eq.s32.totalorder %s25, 1
      %p136 = por %p134, %p135
      %p137 = scmp.ne.s32.totalorder %s129, %s132
      %p138 = scmp.eq.s32.totalorder %s25, 0
      %p139 = por %p137, %p138
      %p140 = scmp.ne.s32.totalorder %s129, %s132
      %p141 = scmp.eq.s32.totalorder %s30, 1
      %p142 = por %p140, %p141
      %p143 = scmp.ne.s32.totalorder %s132, %s133
      %p144 = scmp.eq.s32.totalorder %s30, 0
      %p145 = por %p143, %p144
      %p146 = scmp.ne.s32.totalorder %s132, %s133
      %p147 = scmp.eq.s32.totalorder %s31, 1
      %p148 = por %p146, %p147
      %p150 = scmp.ne.s32.totalorder %s133, %s149
      %p151 = scmp.eq.s32.totalorder %s31, 0
      %p152 = por %p150, %p151
      %s153 = ssub.s32 %s32, %s44
      %s154 = ssub.s32 %s33, %s40
      %s155 = sor.u32 %s153, %s154
      %p156 = scmp.eq.s32.totalorder %s155, 0
      %s158 = sadd.s32 %s157, 1
      %s159 = scalar_select %p156, %s157, %s158
      %p162 = pneg %p156
      %p163 = scmp.eq.s32.totalorder %s25, 1
      %p164 = por %p162, %p163
      %p165 = scmp.ne.s32.totalorder %s157, %s160
      %p166 = scmp.eq.s32.totalorder %s25, 0
      %p167 = por %p165, %p166
      %p168 = scmp.ne.s32.totalorder %s157, %s160
      %p169 = scmp.eq.s32.totalorder %s30, 1
      %p170 = por %p168, %p169
      %p171 = scmp.ne.s32.totalorder %s160, %s161
      %p172 = scmp.eq.s32.totalorder %s30, 0
      %p173 = por %p171, %p172
      %p174 = scmp.ne.s32.totalorder %s160, %s161
      %p175 = scmp.eq.s32.totalorder %s31, 1
      %p176 = por %p174, %p175
      %p178 = scmp.ne.s32.totalorder %s161, %s177
      %p179 = scmp.eq.s32.totalorder %s31, 0
      %p180 = por %p178, %p179
      %s181 = ssub.s32 %s32, %s44
      %p182 = scmp.eq.s32.totalorder %s181, 0
      %s184 = sadd.s32 %s183, 1
      %s185 = scalar_select %p182, %s183, %s184
      %p188 = pneg %p182
      %p189 = scmp.eq.s32.totalorder %s25, 1
      %p190 = por %p188, %p189
      %p191 = scmp.ne.s32.totalorder %s183, %s186
      %p192 = scmp.eq.s32.totalorder %s25, 0
      %p193 = por %p191, %p192
      %p194 = scmp.ne.s32.totalorder %s183, %s186
      %p195 = scmp.eq.s32.totalorder %s30, 1
      %p196 = por %p194, %p195
      %p197 = scmp.ne.s32.totalorder %s186, %s187
      %p198 = scmp.eq.s32.totalorder %s30, 0
      %p199 = por %p197, %p198
      %p200 = scmp.ne.s32.totalorder %s186, %s187
      %p201 = scmp.eq.s32.totalorder %s31, 1
      %p202 = por %p200, %p201
      %p204 = scmp.ne.s32.totalorder %s187, %s203
      %p205 = scmp.eq.s32.totalorder %s31, 0
      %p206 = por %p204, %p205
      %s207 = ssub.s32 %s32, %s44
      %p208 = scmp.eq.s32.totalorder %s207, 0
      %s210 = sadd.s32 %s209, 1
      %s211 = scalar_select %p208, %s209, %s210
      %p214 = pneg %p208
      %p215 = scmp.eq.s32.totalorder %s25, 1
      %p216 = por %p214, %p215
      %p217 = scmp.ne.s32.totalorder %s209, %s212
      %p218 = scmp.eq.s32.totalorder %s25, 0
      %p219 = por %p217, %p218
      %p220 = scmp.ne.s32.totalorder %s209, %s212
      %p221 = scmp.eq.s32.totalorder %s30, 1
      %p222 = por %p220, %p221
      %p223 = scmp.ne.s32.totalorder %s212, %s213
      %p224 = scmp.eq.s32.totalorder %s30, 0
      %p225 = por %p223, %p224
      %p226 = scmp.ne.s32.totalorder %s212, %s213
      %p227 = scmp.eq.s32.totalorder %s31, 1
      %p228 = por %p226, %p227
      %p230 = scmp.ne.s32.totalorder %s213, %s229
      %p231 = scmp.eq.s32.totalorder %s31, 0
      %p232 = por %p230, %p231
      %s234 = sadd.s32 %s233, 1
      %p237 = scmp.eq.s32.totalorder %s25, 1
      %p238 = scmp.ne.s32.totalorder %s233, %s235
      %p239 = scmp.eq.s32.totalorder %s25, 0
      %p240 = por %p238, %p239
      %p241 = scmp.ne.s32.totalorder %s233, %s235
      %p242 = scmp.eq.s32.totalorder %s30, 1
      %p243 = por %p241, %p242
      %p244 = scmp.ne.s32.totalorder %s235, %s236
      %p245 = scmp.eq.s32.totalorder %s30, 0
      %p246 = por %p244, %p245
      %p247 = scmp.ne.s32.totalorder %s235, %s236
      %p248 = scmp.eq.s32.totalorder %s31, 1
      %p249 = por %p247, %p248
      %p251 = scmp.ne.s32.totalorder %s236, %s250
      %p252 = scmp.eq.s32.totalorder %s31, 0
      %p253 = por %p251, %p252
      %s254 = ssub.s32 %s32, %s44
      %p255 = scmp.eq.s32.totalorder %s254, 0
      %s257 = sadd.s32 %s256, 1
      %s258 = scalar_select %p255, %s256, %s257
      %p261 = pneg %p255
      %p262 = scmp.eq.s32.totalorder %s25, 1
      %p263 = por %p261, %p262
      %p264 = scmp.ne.s32.totalorder %s256, %s259
      %p265 = scmp.eq.s32.totalorder %s25, 0
      %p266 = por %p264, %p265
      %p267 = scmp.ne.s32.totalorder %s256, %s259
      %p268 = scmp.eq.s32.totalorder %s30, 1
      %p269 = por %p267, %p268
      %p270 = scmp.ne.s32.totalorder %s259, %s260
      %p271 = scmp.eq.s32.totalorder %s30, 0
      %p272 = por %p270, %p271
      %p273 = scmp.ne.s32.totalorder %s259, %s260
      %p274 = scmp.eq.s32.totalorder %s31, 1
      %p275 = por %p273, %p274
      %p277 = scmp.ne.s32.totalorder %s260, %s276
      %p278 = scmp.eq.s32.totalorder %s31, 0
      %p279 = por %p277, %p278
      %s281 = sadd.s32 %s280, 1
      %p284 = scmp.eq.s32.totalorder %s25, 1
      %p285 = scmp.ne.s32.totalorder %s280, %s282
      %p286 = scmp.eq.s32.totalorder %s25, 0
      %p287 = por %p285, %p286
      %p288 = scmp.ne.s32.totalorder %s280, %s282
      %p289 = scmp.eq.s32.totalorder %s30, 1
      %p290 = por %p288, %p289
      %p291 = scmp.ne.s32.totalorder %s282, %s283
      %p292 = scmp.eq.s32.totalorder %s30, 0
      %p293 = por %p291, %p292
      %p294 = scmp.ne.s32.totalorder %s282, %s283
      %p295 = scmp.eq.s32.totalorder %s31, 1
      %p296 = por %p294, %p295
      %p298 = scmp.ne.s32.totalorder %s283, %s297
      %p299 = scmp.eq.s32.totalorder %s31, 0
      %p300 = por %p298, %p299
      %s301 = ssub.s32 %s32, %s44
      %s302 = ssub.s32 %s33, %s40
      %s303 = sor.u32 %s301, %s302
      %p304 = scmp.eq.s32.totalorder %s303, 0
      %s306 = sadd.s32 %s305, 1
      %s307 = scalar_select %p304, %s305, %s306
      %p310 = pneg %p304
      %p311 = scmp.eq.s32.totalorder %s25, 1
      %p312 = por %p310, %p311
      %p313 = scmp.ne.s32.totalorder %s305, %s308
      %p314 = scmp.eq.s32.totalorder %s25, 0
      %p315 = por %p313, %p314
      %p316 = scmp.ne.s32.totalorder %s305, %s308
      %p317 = scmp.eq.s32.totalorder %s30, 1
      %p318 = por %p316, %p317
      %p319 = scmp.ne.s32.totalorder %s308, %s309
      %p320 = scmp.eq.s32.totalorder %s30, 0
      %p321 = por %p319, %p320
      %p322 = scmp.ne.s32.totalorder %s308, %s309
      %p323 = scmp.eq.s32.totalorder %s31, 1
      %p324 = por %p322, %p323
      %p326 = scmp.ne.s32.totalorder %s309, %s325
      %p327 = scmp.eq.s32.totalorder %s31, 0
      %p328 = por %p326, %p327
      %p329 = scmp.le.s32.totalorder 1, %s25
      %p330 = scmp.lt.s32.totalorder %s25, 3
      %p331 = pnand %p329, %p330
      %p332 = pneg %p331
      // Predicated region
      $region9: #{tpu_custom_call.1} parent=5 // pred_check
        _
      $region10: #{tpu_custom_call.1} parent=5 // pred_check_branch
        %334 = sbr.rel (%p331) target = $region12
      $region11: #{tpu_custom_call.1} parent=5 // pred_region
        %s335 = ssub.s32 %s25, 1
        // Predicated region
        $region13: #{tpu_custom_call.1} parent=11 // pred_check
          %p336 = pneg %p246
        $region14: #{tpu_custom_call.1} parent=11 // pred_check_branch
          %338 = sbr.rel (%p336) target = $region16
        $region15: #{tpu_custom_call.1} parent=11 // pred_region
          _
        $region16: #{tpu_custom_call.1} parent=11 // pred_fallthru
          _
        // Predicated region
        $region17: #{tpu_custom_call.1} parent=11 // pred_check
          %p339 = pneg %p293
        $region18: #{tpu_custom_call.1} parent=11 // pred_check_branch
          %341 = sbr.rel (%p339) target = $region20
        $region19: #{tpu_custom_call.1} parent=11 // pred_region
          _
        $region20: #{tpu_custom_call.1} parent=11 // pred_fallthru
          _
      $region12: #{tpu_custom_call.1} parent=5 // pred_fallthru
        _
      %p342 = scmp.lt.s32.totalorder %s25, 2
      // Predicated region
      $region21: #{tpu_custom_call.1} parent=5 // pred_check
        %p343 = pneg %p342
      $region22: #{tpu_custom_call.1} parent=5 // pred_check_branch
        %345 = sbr.rel (%p343) target = $region24
      $region23: #{tpu_custom_call.1} parent=5 // pred_region
        // Predicated region
        $region25: #{tpu_custom_call.1} parent=23 // pred_check
          %p346 = pneg %p59
        $region26: #{tpu_custom_call.1} parent=23 // pred_check_branch
          %348 = sbr.rel (%p346) target = $region28
        $region27: #{tpu_custom_call.1} parent=23 // pred_region
          %s349 = sand.u32 %s49, 1
          %s350 = scalar_lea.sflag [#allocation3], %s349
          %s351 = sand.u32 %s49, 1
          %s352 = smul.addr %s351, 64
          %s353 = scalar_lea.vmem [#allocation2], %s352
          %s354 = smul.u32 8, %s33
          %s356 = ssub.s32 1024, 1024
          %357 = vsyncadd %s350, %s356
          %s358 = smul.addr %s32, 8
          %s359 = sadd.s32 %s354, %s358
          %s360 = smul.addr %s359, 128
          %s361 = scalar_lea.hbm %s0, %s360
          %s362 = sshll.u32 %s353, 4
          %s363 = int_to_ptr.vmem [resolvable:$true] %s362
          %368 = dma.hbm_to_vmem [thread:$0]  %s361, 1024, %s363, %s350, 128, 128, 8
        $region28: #{tpu_custom_call.1} parent=23 // pred_fallthru
          _
        // Predicated region
        $region29: #{tpu_custom_call.1} parent=23 // pred_check
          %p369 = pneg %p85
        $region30: #{tpu_custom_call.1} parent=23 // pred_check_branch
          %371 = sbr.rel (%p369) target = $region32
        $region31: #{tpu_custom_call.1} parent=23 // pred_region
          %p372 = scmp.lt.s32.totalorder %s32, 1
          %s373 = scalar_select %p372, %s32, 1
          %s374 = smul.addr %s373, 16
          %s375 = smul.addr %s374, 8
          %s376 = scalar_lea.vmem %s1, %s375
        $region32: #{tpu_custom_call.1} parent=23 // pred_fallthru
          _
        // Predicated region
        $region33: #{tpu_custom_call.1} parent=23 // pred_check
          %p377 = pneg %p111
        $region34: #{tpu_custom_call.1} parent=23 // pred_check_branch
          %379 = sbr.rel (%p377) target = $region36
        $region35: #{tpu_custom_call.1} parent=23 // pred_region
          %p380 = scmp.lt.s32.totalorder %s32, 1
          %s381 = scalar_select %p380, %s32, 1
          %s382 = scalar_lea.vmem %s2, %s381
        $region36: #{tpu_custom_call.1} parent=23 // pred_fallthru
          _
        // Predicated region
        $region37: #{tpu_custom_call.1} parent=23 // pred_check
          %p383 = pneg %p139
        $region38: #{tpu_custom_call.1} parent=23 // pred_check_branch
          %385 = sbr.rel (%p383) target = $region40
        $region39: #{tpu_custom_call.1} parent=23 // pred_region
          %s386 = smul.u32 8, %s33
          %p387 = scmp.lt.s32.totalorder %s32, 1
          %s388 = scalar_select %p387, %s32, 1
          %p389 = scmp.lt.s32.totalorder %s386, 7
          %s390 = scalar_select %p389, %s386, 7
          %s391 = smul.addr %s388, 8
          %s392 = sadd.s32 %s390, %s391
          %s393 = smul.addr %s392, 8
          %s394 = scalar_lea.vmem %s3, %s393
          %s395 = smul.u32 8, %s33
        $region40: #{tpu_custom_call.1} parent=23 // pred_fallthru
          _
        // Predicated region
        $region41: #{tpu_custom_call.1} parent=23 // pred_check
          %p396 = pneg %p167
        $region42: #{tpu_custom_call.1} parent=23 // pred_check_branch
          %398 = sbr.rel (%p396) target = $region44
        $region43: #{tpu_custom_call.1} parent=23 // pred_region
          %s399 = smul.u32 8, %s33
          %p400 = scmp.lt.s32.totalorder %s32, 1
          %s401 = scalar_select %p400, %s32, 1
          %p402 = scmp.lt.s32.totalorder %s399, 7
          %s403 = scalar_select %p402, %s399, 7
          %s404 = smul.addr %s401, 8
          %s405 = sadd.s32 %s403, %s404
          %s406 = smul.addr %s405, 8
          %s407 = scalar_lea.vmem %s4, %s406
          %s408 = smul.u32 8, %s33
        $region44: #{tpu_custom_call.1} parent=23 // pred_fallthru
          _
        // Predicated region
        $region45: #{tpu_custom_call.1} parent=23 // pred_check
          %p409 = pneg %p193
        $region46: #{tpu_custom_call.1} parent=23 // pred_check_branch
          %411 = sbr.rel (%p409) target = $region48
        $region47: #{tpu_custom_call.1} parent=23 // pred_region
          %p412 = scmp.lt.s32.totalorder %s32, 1
          %s413 = scalar_select %p412, %s32, 1
          %s414 = scalar_lea.vmem %s5, %s413
        $region48: #{tpu_custom_call.1} parent=23 // pred_fallthru
          _
        // Predicated region
        $region49: #{tpu_custom_call.1} parent=23 // pred_check
          %p415 = pneg %p219
        $region50: #{tpu_custom_call.1} parent=23 // pred_check_branch
          %417 = sbr.rel (%p415) target = $region52
        $region51: #{tpu_custom_call.1} parent=23 // pred_region
          %p418 = scmp.lt.s32.totalorder %s32, 1
          %s419 = scalar_select %p418, %s32, 1
          %s420 = scalar_lea.vmem %s6, %s419
        $region52: #{tpu_custom_call.1} parent=23 // pred_fallthru
          _
        // Predicated region
        $region53: #{tpu_custom_call.1} parent=23 // pred_check
          %p421 = pneg %p266
        $region54: #{tpu_custom_call.1} parent=23 // pred_check_branch
          %423 = sbr.rel (%p421) target = $region56
        $region55: #{tpu_custom_call.1} parent=23 // pred_region
          %s424 = sand.u32 %s256, 1
          %s425 = scalar_lea.sflag [#allocation6], %s424
          %s426 = sand.u32 %s256, 1
          %s427 = smul.addr %s426, 128
          %s428 = scalar_lea.vmem [#allocation5], %s427
          %s430 = ssub.s32 2048, 2048
          %431 = vsyncadd %s425, %s430
          %s432 = smul.addr %s32, 16
          %s433 = smul.addr %s432, 128
          %s434 = scalar_lea.hbm %s8, %s433
          %s435 = sshll.u32 %s428, 4
          %s436 = int_to_ptr.vmem [resolvable:$true] %s435
          %441 = dma.hbm_to_vmem [thread:$0]  %s434, 2048, %s436, %s425, 128, 128, 8
        $region56: #{tpu_custom_call.1} parent=23 // pred_fallthru
          _
      $region24: #{tpu_custom_call.1} parent=5 // pred_fallthru
        _
      %p442 = scmp.le.s32.totalorder 1, %s25
      %p443 = scmp.lt.s32.totalorder %s25, 3
      %p444 = pnand %p442, %p443
      %p445 = pneg %p444
      // Predicated region
      $region57: #{tpu_custom_call.1} parent=5 // pred_check
        _
      $region58: #{tpu_custom_call.1} parent=5 // pred_check_branch
        %447 = sbr.rel (%p444) target = $region60
      $region59: #{tpu_custom_call.1} parent=5 // pred_region
        %s448 = ssub.s32 %s25, 1
        %s449 = sand.u32 %s52, 1
        %s450 = scalar_lea.sflag [#allocation3], %s449
        %s451 = sand.u32 %s52, 1
        %s452 = smul.addr %s451, 64
        %s453 = scalar_lea.vmem [#allocation2], %s452
        // Predicated region
        $region61: #{tpu_custom_call.1} parent=59 // pred_check
          %p454 = pneg %p65
        $region62: #{tpu_custom_call.1} parent=59 // pred_check_branch
          %456 = sbr.rel (%p454) target = $region64
        $region63: #{tpu_custom_call.1} parent=59 // pred_region
          %457 = dma.done %s450, 1024
        $region64: #{tpu_custom_call.1} parent=59 // pred_fallthru
          _
        %s458 = sand.u32 %s259, 1
        %s459 = scalar_lea.sflag [#allocation6], %s458
        %s460 = sand.u32 %s259, 1
        %s461 = smul.addr %s460, 128
        %s462 = scalar_lea.vmem [#allocation5], %s461
        // Predicated region
        $region65: #{tpu_custom_call.1} parent=59 // pred_check
          %p463 = pneg %p272
        $region66: #{tpu_custom_call.1} parent=59 // pred_check_branch
          %465 = sbr.rel (%p463) target = $region68
        $region67: #{tpu_custom_call.1} parent=59 // pred_region
          %466 = dma.done %s459, 2048
        $region68: #{tpu_custom_call.1} parent=59 // pred_fallthru
          _
        %s467 = sand.u32 %s52, 1
        %s468 = scalar_lea.sflag [#allocation3], %s467
        %s469 = sand.u32 %s52, 1
        %s470 = smul.addr %s469, 64
        %s471 = scalar_lea.vmem [#allocation2], %s470
        %p472 = pneg %p65
        %p473 = pneg %p62
        %p474 = scmp.lt.s32.totalorder %s34, 1
        %s475 = scalar_select %p474, %s34, 1
        %s476 = smul.addr %s475, 16
        %s477 = smul.addr %s476, 8
        %s478 = scalar_lea.vmem %s1, %s477
        %p479 = pneg %p91
        %p480 = pneg %p88
        %p481 = scmp.lt.s32.totalorder %s34, 1
        %s482 = scalar_select %p481, %s34, 1
        %s483 = scalar_lea.vmem %s2, %s482
        %p484 = pneg %p117
        %p485 = pneg %p114
        %s486 = smul.u32 8, %s35
        %p487 = scmp.lt.s32.totalorder %s34, 1
        %s488 = scalar_select %p487, %s34, 1
        %p489 = scmp.lt.s32.totalorder %s486, 7
        %s490 = scalar_select %p489, %s486, 7
        %s491 = smul.addr %s488, 8
        %s492 = sadd.s32 %s490, %s491
        %s493 = smul.addr %s492, 8
        %s494 = scalar_lea.vmem %s3, %s493
        %p495 = pneg %p145
        %p496 = pneg %p142
        %s497 = smul.u32 8, %s35
        %p498 = scmp.lt.s32.totalorder %s34, 1
        %s499 = scalar_select %p498, %s34, 1
        %p500 = scmp.lt.s32.totalorder %s497, 7
        %s501 = scalar_select %p500, %s497, 7
        %s502 = smul.addr %s499, 8
        %s503 = sadd.s32 %s501, %s502
        %s504 = smul.addr %s503, 8
        %s505 = scalar_lea.vmem %s4, %s504
        %p506 = pneg %p173
        %p507 = pneg %p170
        %p508 = scmp.lt.s32.totalorder %s34, 1
        %s509 = scalar_select %p508, %s34, 1
        %s510 = scalar_lea.vmem %s5, %s509
        %p511 = pneg %p199
        %p512 = pneg %p196
        %p513 = scmp.lt.s32.totalorder %s34, 1
        %s514 = scalar_select %p513, %s34, 1
        %s515 = scalar_lea.vmem %s6, %s514
        %p516 = pneg %p225
        %p517 = pneg %p222
        %p518 = pneg %p246
        %p519 = pneg %p243
        %s520 = sand.u32 %s259, 1
        %s521 = scalar_lea.sflag [#allocation6], %s520
        %s522 = sand.u32 %s259, 1
        %s523 = smul.addr %s522, 128
        %s524 = scalar_lea.vmem [#allocation5], %s523
        %p525 = pneg %p272
        %p526 = pneg %p269
        %p527 = pneg %p293
        %p528 = pneg %p290
        %p529 = pneg %p321
        %p530 = pneg %p318
        %s531 = sand.u32 %s308, 1
        %s532 = scalar_lea.sflag [#allocation4], %s531
        %s533 = sand.u32 %s308, 1
        %s534 = smul.addr %s533, 64
        %s535 = scalar_lea.vmem [#allocation7], %s534
        %s536 = smul.u32 8, %s35
        %p537 = scmp.lt.s32.totalorder %s34, 1
        %s538 = scalar_select %p537, %s34, 1
        %s539 = smul.addr %s538, 16
        %s540 = smul.addr %s539, 8
        %s541 = scalar_lea.vmem %s1, %s540
        %p542 = scmp.lt.s32.totalorder %s34, 1
        %s543 = scalar_select %p542, %s34, 1
        %s544 = scalar_lea.vmem %s2, %s543
        %s545 = smul.u32 8, %s35
        %p546 = scmp.lt.s32.totalorder %s34, 1
        %s547 = scalar_select %p546, %s34, 1
        %p548 = scmp.lt.s32.totalorder %s545, 7
        %s549 = scalar_select %p548, %s545, 7
        %s550 = smul.addr %s547, 8
        %s551 = sadd.s32 %s549, %s550
        %s552 = smul.addr %s551, 8
        %s553 = scalar_lea.vmem %s3, %s552
        %s554 = smul.u32 8, %s35
        %s555 = smul.u32 8, %s35
        %p556 = scmp.lt.s32.totalorder %s34, 1
        %s557 = scalar_select %p556, %s34, 1
        %p558 = scmp.lt.s32.totalorder %s555, 7
        %s559 = scalar_select %p558, %s555, 7
        %s560 = smul.addr %s557, 8
        %s561 = sadd.s32 %s559, %s560
        %s562 = smul.addr %s561, 8
        %s563 = scalar_lea.vmem %s4, %s562
        %s564 = smul.u32 8, %s35
        %p565 = scmp.lt.s32.totalorder %s34, 1
        %s566 = scalar_select %p565, %s34, 1
        %s567 = scalar_lea.vmem %s5, %s566
        %p568 = scmp.lt.s32.totalorder %s34, 1
        %s569 = scalar_select %p568, %s34, 1
        %s570 = scalar_lea.vmem %s6, %s569
        %s571 = smul.u32 8, %s35
        %v572 = vld [vmem:[%s453] sm:$0xff]
        %v573 = vld [vmem:[%s453 + $0x8] sm:$0xff]
        %v574 = vld [vmem:[%s453 + $0x10] sm:$0xff]
        %v575 = vld [vmem:[%s453 + $0x18] sm:$0xff]
        %v576 = vld [vmem:[%s453 + $0x20] sm:$0xff]
        %v577 = vld [vmem:[%s453 + $0x28] sm:$0xff]
        %v578 = vld [vmem:[%s453 + $0x30] sm:$0xff]
        %v579 = vld [vmem:[%s453 + $0x38] sm:$0xff]
        %v580 = vld [vmem:[%s541] sm:$0xff]
        %v581 = vld [vmem:[%s541 + $0x8] sm:$0xff]
        %v582 = vld [vmem:[%s541 + $0x10] sm:$0xff]
        %v583 = vld [vmem:[%s541 + $0x18] sm:$0xff]
        %v584 = vld [vmem:[%s541 + $0x20] sm:$0xff]
        %v585 = vld [vmem:[%s541 + $0x28] sm:$0xff]
        %v586 = vld [vmem:[%s541 + $0x30] sm:$0xff]
        %v587 = vld [vmem:[%s541 + $0x38] sm:$0xff]
        %v588 = vld [vmem:[%s541 + $0x40] sm:$0xff]
        %v589 = vld [vmem:[%s541 + $0x48] sm:$0xff]
        %v590 = vld [vmem:[%s541 + $0x50] sm:$0xff]
        %v591 = vld [vmem:[%s541 + $0x58] sm:$0xff]
        %v592 = vld [vmem:[%s541 + $0x60] sm:$0xff]
        %v593 = vld [vmem:[%s541 + $0x68] sm:$0xff]
        %v594 = vld [vmem:[%s541 + $0x70] sm:$0xff]
        %v595 = vld [vmem:[%s541 + $0x78] sm:$0xff]
        %v596 = vld [vmem:[%s544] sm:$0x1]
        %v598 = vlaneseq
        %v599 = vshrl.u32 %v598, 7
        %v600 = vsub.s32 0, %v599
        %v601 = vrot.slane %v596, %v600
        %603 = vmatprep.subr.mxu0 0.0
        %604 = vmatpush1.msra.mxu0 %v595
        %605 = vmatprep.subr.mxu0 0.0
        %606 = vmatpush1.msra.mxu0 %v594
        %607 = vmatprep.subr.mxu0 0.0
        %608 = vmatpush1.msra.mxu0 %v593
        %609 = vmatprep.subr.mxu0 0.0
        %610 = vmatpush1.msra.mxu0 %v592
        %611 = vmatprep.subr.mxu0 0.0
        %612 = vmatpush1.msra.mxu0 %v591
        %613 = vmatprep.subr.mxu0 0.0
        %614 = vmatpush1.msra.mxu0 %v590
        %615 = vmatprep.subr.mxu0 0.0
        %616 = vmatpush1.msra.mxu0 %v589
        %617 = vmatprep.subr.mxu0 0.0
        %618 = vmatpush1.msra.mxu0 %v588
        %619 = vmatprep.subr.mxu0 0.0
        %620 = vmatpush1.msra.mxu0 %v587
        %621 = vmatprep.subr.mxu0 0.0
        %622 = vmatpush1.msra.mxu0 %v586
        %623 = vmatprep.subr.mxu0 0.0
        %624 = vmatpush1.msra.mxu0 %v585
        %625 = vmatprep.subr.mxu0 0.0
        %626 = vmatpush1.msra.mxu0 %v584
        %627 = vmatprep.subr.mxu0 0.0
        %628 = vmatpush1.msra.mxu0 %v583
        %629 = vmatprep.subr.mxu0 0.0
        %630 = vmatpush1.msra.mxu0 %v582
        %631 = vmatprep.subr.mxu0 0.0
        %632 = vmatpush1.msra.mxu0 %v581
        %633 = vmatprep.subr.mxu0 0.0
        %634 = vmatpush1.msra.mxu0 %v580
        %635 = vmatprep.subr.mxu0 0.0
        %636 = vmatpush2.msra.mxu0 0.0
        %637 = vmatprep.subr.mxu0 0.0
        %638 = vmatpush2.msra.mxu0 0.0
        %639 = vmatprep.subr.mxu0 0.0
        %640 = vmatpush2.msra.mxu0 0.0
        %641 = vmatprep.subr.mxu0 0.0
        %642 = vmatpush2.msra.mxu0 0.0
        %643 = vmatprep.subr.mxu0 0.0
        %644 = vmatpush2.msra.mxu0 0.0
        %645 = vmatprep.subr.mxu0 0.0
        %646 = vmatpush2.msra.mxu0 0.0
        %647 = vmatprep.subr.mxu0 0.0
        %648 = vmatpush2.msra.mxu0 0.0
        %649 = vmatprep.subr.mxu0 0.0
        %650 = vmatpush2.msra.mxu0 0.0
        %651 = vmatprep.subr.mxu0 0.0
        %652 = vmatpush2.msra.mxu0 0.0
        %653 = vmatprep.subr.mxu0 0.0
        %654 = vmatpush2.msra.mxu0 0.0
        %655 = vmatprep.subr.mxu0 0.0
        %656 = vmatpush2.msra.mxu0 0.0
        %657 = vmatprep.subr.mxu0 0.0
        %658 = vmatpush2.msra.mxu0 0.0
        %659 = vmatprep.subr.mxu0 0.0
        %660 = vmatpush2.msra.mxu0 0.0
        %661 = vmatprep.subr.mxu0 0.0
        %662 = vmatpush2.msra.mxu0 0.0
        %663 = vmatprep.subr.mxu0 0.0
        %664 = vmatpush2.msra.mxu0 0.0
        %665 = vmatprep.subr.mxu0 0.0
        %666 = vmatpush2.msra.mxu0 0.0
        %667 = vmatprep.mubr.f32.mxu0 0.0
        %668 = vmatmul.mubr.f32.gmra.mxu0 %v572
        %v669 = vpop.f32.mrf.mxu0
        %v670 = vadd.f32 %v601, %v669
        %v671 = vpop.f32.mrf.mxu0
        %672 = vmatprep.mubr.f32.mxu0 0.0
        %673 = vmatmul.mubr.f32.gmra.mxu0 %v573
        %v674 = vpop.f32.mrf.mxu0
        %v675 = vadd.f32 %v601, %v674
        %v676 = vpop.f32.mrf.mxu0
        %677 = vmatprep.mubr.f32.mxu0 0.0
        %678 = vmatmul.mubr.f32.gmra.mxu0 %v574
        %v679 = vpop.f32.mrf.mxu0
        %v680 = vadd.f32 %v601, %v679
        %v681 = vpop.f32.mrf.mxu0
        %682 = vmatprep.mubr.f32.mxu0 0.0
        %683 = vmatmul.mubr.f32.gmra.mxu0 %v575
        %v684 = vpop.f32.mrf.mxu0
        %v685 = vadd.f32 %v601, %v684
        %v686 = vpop.f32.mrf.mxu0
        %687 = vmatprep.mubr.f32.mxu0 0.0
        %688 = vmatmul.mubr.f32.gmra.mxu0 %v576
        %v689 = vpop.f32.mrf.mxu0
        %v690 = vadd.f32 %v601, %v689
        %v691 = vpop.f32.mrf.mxu0
        %692 = vmatprep.mubr.f32.mxu0 0.0
        %693 = vmatmul.mubr.f32.gmra.mxu0 %v577
        %v694 = vpop.f32.mrf.mxu0
        %v695 = vadd.f32 %v601, %v694
        %v696 = vpop.f32.mrf.mxu0
        %697 = vmatprep.mubr.f32.mxu0 0.0
        %698 = vmatmul.mubr.f32.gmra.mxu0 %v578
        %v699 = vpop.f32.mrf.mxu0
        %v700 = vadd.f32 %v601, %v699
        %v701 = vpop.f32.mrf.mxu0
        %702 = vmatprep.mubr.f32.mxu0 0.0
        %703 = vmatmul.mubr.f32.gmra.mxu0 %v579
        %v704 = vpop.f32.mrf.mxu0
        %v705 = vadd.f32 %v601, %v704
        %v706 = vpop.f32.mrf.mxu0
        %707 = vdwg.mxu0
        %708 = vmax.xlane.f32.xlu0 %v670
        %v709 = vpop.xlane.xlu0 %708
        %710 = vmax.xlane.f32.xlu0 %v675
        %v711 = vpop.xlane.xlu0 %710
        %712 = vmax.xlane.f32.xlu0 %v680
        %v713 = vpop.xlane.xlu0 %712
        %714 = vmax.xlane.f32.xlu0 %v685
        %v715 = vpop.xlane.xlu0 %714
        %716 = vmax.xlane.f32.xlu0 %v690
        %v717 = vpop.xlane.xlu0 %716
        %718 = vmax.xlane.f32.xlu0 %v695
        %v719 = vpop.xlane.xlu0 %718
        %720 = vmax.xlane.f32.xlu0 %v700
        %v721 = vpop.xlane.xlu0 %720
        %722 = vmax.xlane.f32.xlu0 %v705
        %v723 = vpop.xlane.xlu0 %722
        %v724 = vsub.f32 %v670, %v709
        %v725 = vsub.f32 %v675, %v711
        %v726 = vsub.f32 %v680, %v713
        %v727 = vsub.f32 %v685, %v715
        %v728 = vsub.f32 %v690, %v717
        %v729 = vsub.f32 %v695, %v719
        %v730 = vsub.f32 %v700, %v721
        %v731 = vsub.f32 %v705, %v723
        %v732 = vmul.f32 %v724, 1.442695
        %v733 = vpow.pop %v732
        %v734 = vmul.f32 %v725, 1.442695
        %v735 = vpow.pop %v734
        %v736 = vmul.f32 %v726, 1.442695
        %v737 = vpow.pop %v736
        %v738 = vmul.f32 %v727, 1.442695
        %v739 = vpow.pop %v738
        %v740 = vmul.f32 %v728, 1.442695
        %v741 = vpow.pop %v740
        %v742 = vmul.f32 %v729, 1.442695
        %v743 = vpow.pop %v742
        %v744 = vmul.f32 %v730, 1.442695
        %v745 = vpow.pop %v744
        %v746 = vmul.f32 %v731, 1.442695
        %v747 = vpow.pop %v746
        %748 = vadd.xlane.f32.xlu0 %v733
        %v749 = vpop.xlane.xlu0 %748
        %750 = vadd.xlane.f32.xlu0 %v735
        %v751 = vpop.xlane.xlu0 %750
        %752 = vadd.xlane.f32.xlu0 %v737
        %v753 = vpop.xlane.xlu0 %752
        %754 = vadd.xlane.f32.xlu0 %v739
        %v755 = vpop.xlane.xlu0 %754
        %756 = vadd.xlane.f32.xlu0 %v741
        %v757 = vpop.xlane.xlu0 %756
        %758 = vadd.xlane.f32.xlu0 %v743
        %v759 = vpop.xlane.xlu0 %758
        %760 = vadd.xlane.f32.xlu0 %v745
        %v761 = vpop.xlane.xlu0 %760
        %762 = vadd.xlane.f32.xlu0 %v747
        %v763 = vpop.xlane.xlu0 %762
        %v764 = vrcp.pop %v749
        %v765 = vrcp.pop %v751
        %v766 = vrcp.pop %v753
        %v767 = vrcp.pop %v755
        %v768 = vrcp.pop %v757
        %v769 = vrcp.pop %v759
        %v770 = vrcp.pop %v761
        %v771 = vrcp.pop %v763
        %v772 = vmul.f32 %v733, %v764
        %v773 = vmul.f32 %v735, %v765
        %v774 = vmul.f32 %v737, %v766
        %v775 = vmul.f32 %v739, %v767
        %v776 = vmul.f32 %v741, %v768
        %v777 = vmul.f32 %v743, %v769
        %v778 = vmul.f32 %v745, %v770
        %v779 = vmul.f32 %v747, %v771
        %v780 = vld [vmem:[%s7] sm:$0x1]
        %v781 = vld [vmem:[%s553] sm:$0xff]
        %v782 = vld [vmem:[%s553 + $0x8] sm:$0xff]
        %v783 = vld [vmem:[%s553 + $0x10] sm:$0xff]
        %v784 = vld [vmem:[%s553 + $0x18] sm:$0xff]
        %v785 = vld [vmem:[%s553 + $0x20] sm:$0xff]
        %v786 = vld [vmem:[%s553 + $0x28] sm:$0xff]
        %v787 = vld [vmem:[%s553 + $0x30] sm:$0xff]
        %v788 = vld [vmem:[%s553 + $0x38] sm:$0xff]
        %v789 = vld [vmem:[%s570] sm:$0x1]
        %791 = vset.pattern.permute.xlu0 0
        %792 = vperm.xlu0 %791, %v781
        %v793 = vpop.permute.xlu0 %792
        %796 = vset.pattern.permute.xlu0 0
        %797 = vperm.xlu0 %796, %v782
        %v798 = vpop.permute.xlu0 %797
        %801 = vset.pattern.permute.xlu0 0
        %802 = vperm.xlu0 %801, %v783
        %v803 = vpop.permute.xlu0 %802
        %806 = vset.pattern.permute.xlu0 0
        %807 = vperm.xlu0 %806, %v784
        %v808 = vpop.permute.xlu0 %807
        %811 = vset.pattern.permute.xlu0 0
        %812 = vperm.xlu0 %811, %v785
        %v813 = vpop.permute.xlu0 %812
        %816 = vset.pattern.permute.xlu0 0
        %817 = vperm.xlu0 %816, %v786
        %v818 = vpop.permute.xlu0 %817
        %821 = vset.pattern.permute.xlu0 0
        %822 = vperm.xlu0 %821, %v787
        %v823 = vpop.permute.xlu0 %822
        %826 = vset.pattern.permute.xlu0 0
        %827 = vperm.xlu0 %826, %v788
        %v828 = vpop.permute.xlu0 %827
        %v831 = vlaneseq
        %v832 = vshrl.u32 %v831, 7
        %v833 = vsub.s32 0, %v832
        %v834 = vrot.slane %v789, %v833
        %v836 = vmul.f32 %v793, %v834
        %v837 = vmul.f32 %v798, %v834
        %v838 = vmul.f32 %v803, %v834
        %v839 = vmul.f32 %v808, %v834
        %v840 = vmul.f32 %v813, %v834
        %v841 = vmul.f32 %v818, %v834
        %v842 = vmul.f32 %v823, %v834
        %v843 = vmul.f32 %v828, %v834
        %v844 = vld [vmem:[%s567] sm:$0x1]
        %v845 = vld [vmem:[%s563] sm:$0xff]
        %v846 = vld [vmem:[%s563 + $0x8] sm:$0xff]
        %v847 = vld [vmem:[%s563 + $0x10] sm:$0xff]
        %v848 = vld [vmem:[%s563 + $0x18] sm:$0xff]
        %v849 = vld [vmem:[%s563 + $0x20] sm:$0xff]
        %v850 = vld [vmem:[%s563 + $0x28] sm:$0xff]
        %v851 = vld [vmem:[%s563 + $0x30] sm:$0xff]
        %v852 = vld [vmem:[%s563 + $0x38] sm:$0xff]
        %v854 = vlaneseq
        %v855 = vshrl.u32 %v854, 7
        %v856 = vsub.s32 0, %v855
        %v857 = vrot.slane %v844, %v856
        %860 = vset.pattern.permute.xlu0 0
        %861 = vperm.xlu0 %860, %v845
        %v862 = vpop.permute.xlu0 %861
        %865 = vset.pattern.permute.xlu0 0
        %866 = vperm.xlu0 %865, %v846
        %v867 = vpop.permute.xlu0 %866
        %870 = vset.pattern.permute.xlu0 0
        %871 = vperm.xlu0 %870, %v847
        %v872 = vpop.permute.xlu0 %871
        %875 = vset.pattern.permute.xlu0 0
        %876 = vperm.xlu0 %875, %v848
        %v877 = vpop.permute.xlu0 %876
        %880 = vset.pattern.permute.xlu0 0
        %881 = vperm.xlu0 %880, %v849
        %v882 = vpop.permute.xlu0 %881
        %885 = vset.pattern.permute.xlu0 0
        %886 = vperm.xlu0 %885, %v850
        %v887 = vpop.permute.xlu0 %886
        %890 = vset.pattern.permute.xlu0 0
        %891 = vperm.xlu0 %890, %v851
        %v892 = vpop.permute.xlu0 %891
        %895 = vset.pattern.permute.xlu0 0
        %896 = vperm.xlu0 %895, %v852
        %v897 = vpop.permute.xlu0 %896
        %v899 = vmul.f32 %v857, %v862
        %v900 = vmul.f32 %v857, %v867
        %v901 = vmul.f32 %v857, %v872
        %v902 = vmul.f32 %v857, %v877
        %v903 = vmul.f32 %v857, %v882
        %v904 = vmul.f32 %v857, %v887
        %v905 = vmul.f32 %v857, %v892
        %v906 = vmul.f32 %v857, %v897
        %v907 = vmin.f32 %v836, %v899
        %v908 = vmin.f32 %v837, %v900
        %v909 = vmin.f32 %v838, %v901
        %v910 = vmin.f32 %v839, %v902
        %v911 = vmin.f32 %v840, %v903
        %v912 = vmin.f32 %v841, %v904
        %v913 = vmin.f32 %v842, %v905
        %v914 = vmin.f32 %v843, %v906
        %v916 = vlaneseq
        %v917 = vshrl.u32 %v916, 7
        %v918 = vsub.s32 0, %v917
        %v919 = vrot.slane %v780, %v918
        %v921 = vadd.f32 %v907, %v919
        %v922 = vadd.f32 %v908, %v919
        %v923 = vadd.f32 %v909, %v919
        %v924 = vadd.f32 %v910, %v919
        %v925 = vadd.f32 %v911, %v919
        %v926 = vadd.f32 %v912, %v919
        %v927 = vadd.f32 %v913, %v919
        %v928 = vadd.f32 %v914, %v919
        %929 = vmax.xlane.f32.xlu0 %v921
        %v930 = vpop.xlane.xlu0 %929
        %931 = vmax.xlane.f32.xlu0 %v922
        %v932 = vpop.xlane.xlu0 %931
        %933 = vmax.xlane.f32.xlu0 %v923
        %v934 = vpop.xlane.xlu0 %933
        %935 = vmax.xlane.f32.xlu0 %v924
        %v936 = vpop.xlane.xlu0 %935
        %937 = vmax.xlane.f32.xlu0 %v925
        %v938 = vpop.xlane.xlu0 %937
        %939 = vmax.xlane.f32.xlu0 %v926
        %v940 = vpop.xlane.xlu0 %939
        %941 = vmax.xlane.f32.xlu0 %v927
        %v942 = vpop.xlane.xlu0 %941
        %943 = vmax.xlane.f32.xlu0 %v928
        %v944 = vpop.xlane.xlu0 %943
        %v945 = vsub.f32 %v921, %v930
        %v946 = vsub.f32 %v922, %v932
        %v947 = vsub.f32 %v923, %v934
        %v948 = vsub.f32 %v924, %v936
        %v949 = vsub.f32 %v925, %v938
        %v950 = vsub.f32 %v926, %v940
        %v951 = vsub.f32 %v927, %v942
        %v952 = vsub.f32 %v928, %v944
        %v953 = vmul.f32 %v945, 1.442695
        %v954 = vpow.pop %v953
        %v955 = vmul.f32 %v946, 1.442695
        %v956 = vpow.pop %v955
        %v957 = vmul.f32 %v947, 1.442695
        %v958 = vpow.pop %v957
        %v959 = vmul.f32 %v948, 1.442695
        %v960 = vpow.pop %v959
        %v961 = vmul.f32 %v949, 1.442695
        %v962 = vpow.pop %v961
        %v963 = vmul.f32 %v950, 1.442695
        %v964 = vpow.pop %v963
        %v965 = vmul.f32 %v951, 1.442695
        %v966 = vpow.pop %v965
        %v967 = vmul.f32 %v952, 1.442695
        %v968 = vpow.pop %v967
        %969 = vadd.xlane.f32.xlu0 %v954
        %v970 = vpop.xlane.xlu0 %969
        %971 = vadd.xlane.f32.xlu0 %v956
        %v972 = vpop.xlane.xlu0 %971
        %973 = vadd.xlane.f32.xlu0 %v958
        %v974 = vpop.xlane.xlu0 %973
        %975 = vadd.xlane.f32.xlu0 %v960
        %v976 = vpop.xlane.xlu0 %975
        %977 = vadd.xlane.f32.xlu0 %v962
        %v978 = vpop.xlane.xlu0 %977
        %979 = vadd.xlane.f32.xlu0 %v964
        %v980 = vpop.xlane.xlu0 %979
        %981 = vadd.xlane.f32.xlu0 %v966
        %v982 = vpop.xlane.xlu0 %981
        %983 = vadd.xlane.f32.xlu0 %v968
        %v984 = vpop.xlane.xlu0 %983
        %v985 = vrcp.pop %v970
        %v986 = vrcp.pop %v972
        %v987 = vrcp.pop %v974
        %v988 = vrcp.pop %v976
        %v989 = vrcp.pop %v978
        %v990 = vrcp.pop %v980
        %v991 = vrcp.pop %v982
        %v992 = vrcp.pop %v984
        %v993 = vmul.f32 %v954, %v985
        %v994 = vmul.f32 %v956, %v986
        %v995 = vmul.f32 %v958, %v987
        %v996 = vmul.f32 %v960, %v988
        %v997 = vmul.f32 %v962, %v989
        %v998 = vmul.f32 %v964, %v990
        %v999 = vmul.f32 %v966, %v991
        %v1000 = vmul.f32 %v968, %v992
        %v1001 = vmul.f32 %v772, %v993
        %v1002 = vmul.f32 %v773, %v994
        %v1003 = vmul.f32 %v774, %v995
        %v1004 = vmul.f32 %v775, %v996
        %v1005 = vmul.f32 %v776, %v997
        %v1006 = vmul.f32 %v777, %v998
        %v1007 = vmul.f32 %v778, %v999
        %v1008 = vmul.f32 %v779, %v1000
        %v1009 = vadd.f32 %v1001, %v919
        %v1010 = vadd.f32 %v1002, %v919
        %v1011 = vadd.f32 %v1003, %v919
        %v1012 = vadd.f32 %v1004, %v919
        %v1013 = vadd.f32 %v1005, %v919
        %v1014 = vadd.f32 %v1006, %v919
        %v1015 = vadd.f32 %v1007, %v919
        %v1016 = vadd.f32 %v1008, %v919
        %v1017 = vmul.f32 %v1009, 1.442695
        %v1018 = vpow.pop %v1017
        %v1019 = vmul.f32 %v1010, 1.442695
        %v1020 = vpow.pop %v1019
        %v1021 = vmul.f32 %v1011, 1.442695
        %v1022 = vpow.pop %v1021
        %v1023 = vmul.f32 %v1012, 1.442695
        %v1024 = vpow.pop %v1023
        %v1025 = vmul.f32 %v1013, 1.442695
        %v1026 = vpow.pop %v1025
        %v1027 = vmul.f32 %v1014, 1.442695
        %v1028 = vpow.pop %v1027
        %v1029 = vmul.f32 %v1015, 1.442695
        %v1030 = vpow.pop %v1029
        %v1031 = vmul.f32 %v1016, 1.442695
        %v1032 = vpow.pop %v1031
        %1033 = vadd.xlane.f32.xlu0 %v1018
        %v1034 = vpop.xlane.xlu0 %1033
        %1035 = vadd.xlane.f32.xlu0 %v1020
        %v1036 = vpop.xlane.xlu0 %1035
        %1037 = vadd.xlane.f32.xlu0 %v1022
        %v1038 = vpop.xlane.xlu0 %1037
        %1039 = vadd.xlane.f32.xlu0 %v1024
        %v1040 = vpop.xlane.xlu0 %1039
        %1041 = vadd.xlane.f32.xlu0 %v1026
        %v1042 = vpop.xlane.xlu0 %1041
        %1043 = vadd.xlane.f32.xlu0 %v1028
        %v1044 = vpop.xlane.xlu0 %1043
        %1045 = vadd.xlane.f32.xlu0 %v1030
        %v1046 = vpop.xlane.xlu0 %1045
        %1047 = vadd.xlane.f32.xlu0 %v1032
        %v1048 = vpop.xlane.xlu0 %1047
        %v1049 = vrcp.pop %v1034
        %v1050 = vrcp.pop %v1036
        %v1051 = vrcp.pop %v1038
        %v1052 = vrcp.pop %v1040
        %v1053 = vrcp.pop %v1042
        %v1054 = vrcp.pop %v1044
        %v1055 = vrcp.pop %v1046
        %v1056 = vrcp.pop %v1048
        %v1057 = vmul.f32 %v1018, %v1049
        %v1058 = vmul.f32 %v1020, %v1050
        %v1059 = vmul.f32 %v1022, %v1051
        %v1060 = vmul.f32 %v1024, %v1052
        %v1061 = vmul.f32 %v1026, %v1053
        %v1062 = vmul.f32 %v1028, %v1054
        %v1063 = vmul.f32 %v1030, %v1055
        %v1064 = vmul.f32 %v1032, %v1056
        %v1065 = vld [vmem:[%s462] sm:$0xff]
        %v1066 = vld [vmem:[%s462 + $0x8] sm:$0xff]
        %v1067 = vld [vmem:[%s462 + $0x10] sm:$0xff]
        %v1068 = vld [vmem:[%s462 + $0x18] sm:$0xff]
        %v1069 = vld [vmem:[%s462 + $0x20] sm:$0xff]
        %v1070 = vld [vmem:[%s462 + $0x28] sm:$0xff]
        %v1071 = vld [vmem:[%s462 + $0x30] sm:$0xff]
        %v1072 = vld [vmem:[%s462 + $0x38] sm:$0xff]
        %v1073 = vld [vmem:[%s462 + $0x40] sm:$0xff]
        %v1074 = vld [vmem:[%s462 + $0x48] sm:$0xff]
        %v1075 = vld [vmem:[%s462 + $0x50] sm:$0xff]
        %v1076 = vld [vmem:[%s462 + $0x58] sm:$0xff]
        %v1077 = vld [vmem:[%s462 + $0x60] sm:$0xff]
        %v1078 = vld [vmem:[%s462 + $0x68] sm:$0xff]
        %v1079 = vld [vmem:[%s462 + $0x70] sm:$0xff]
        %v1080 = vld [vmem:[%s462 + $0x78] sm:$0xff]
        %v1081 = vld [vmem:[%s9] sm:$0x1]
        %v1083 = vlaneseq
        %v1084 = vshrl.u32 %v1083, 7
        %v1085 = vsub.s32 0, %v1084
        %v1086 = vrot.slane %v1081, %v1085
        %1088 = vmatprep.subr.mxu0 0.0
        %1089 = vmatpush1.msra.mxu0 %v1080
        %1090 = vmatprep.subr.mxu0 0.0
        %1091 = vmatpush1.msra.mxu0 %v1079
        %1092 = vmatprep.subr.mxu0 0.0
        %1093 = vmatpush1.msra.mxu0 %v1078
        %1094 = vmatprep.subr.mxu0 0.0
        %1095 = vmatpush1.msra.mxu0 %v1077
        %1096 = vmatprep.subr.mxu0 0.0
        %1097 = vmatpush1.msra.mxu0 %v1076
        %1098 = vmatprep.subr.mxu0 0.0
        %1099 = vmatpush1.msra.mxu0 %v1075
        %1100 = vmatprep.subr.mxu0 0.0
        %1101 = vmatpush1.msra.mxu0 %v1074
        %1102 = vmatprep.subr.mxu0 0.0
        %1103 = vmatpush1.msra.mxu0 %v1073
        %1104 = vmatprep.subr.mxu0 0.0
        %1105 = vmatpush1.msra.mxu0 %v1072
        %1106 = vmatprep.subr.mxu0 0.0
        %1107 = vmatpush1.msra.mxu0 %v1071
        %1108 = vmatprep.subr.mxu0 0.0
        %1109 = vmatpush1.msra.mxu0 %v1070
        %1110 = vmatprep.subr.mxu0 0.0
        %1111 = vmatpush1.msra.mxu0 %v1069
        %1112 = vmatprep.subr.mxu0 0.0
        %1113 = vmatpush1.msra.mxu0 %v1068
        %1114 = vmatprep.subr.mxu0 0.0
        %1115 = vmatpush1.msra.mxu0 %v1067
        %1116 = vmatprep.subr.mxu0 0.0
        %1117 = vmatpush1.msra.mxu0 %v1066
        %1118 = vmatprep.subr.mxu0 0.0
        %1119 = vmatpush1.msra.mxu0 %v1065
        %1120 = vmatprep.subr.mxu0 0.0
        %1121 = vmatpush2.msra.mxu0 0.0
        %1122 = vmatprep.subr.mxu0 0.0
        %1123 = vmatpush2.msra.mxu0 0.0
        %1124 = vmatprep.subr.mxu0 0.0
        %1125 = vmatpush2.msra.mxu0 0.0
        %1126 = vmatprep.subr.mxu0 0.0
        %1127 = vmatpush2.msra.mxu0 0.0
        %1128 = vmatprep.subr.mxu0 0.0
        %1129 = vmatpush2.msra.mxu0 0.0
        %1130 = vmatprep.subr.mxu0 0.0
        %1131 = vmatpush2.msra.mxu0 0.0
        %1132 = vmatprep.subr.mxu0 0.0
        %1133 = vmatpush2.msra.mxu0 0.0
        %1134 = vmatprep.subr.mxu0 0.0
        %1135 = vmatpush2.msra.mxu0 0.0
        %1136 = vmatprep.subr.mxu0 0.0
        %1137 = vmatpush2.msra.mxu0 0.0
        %1138 = vmatprep.subr.mxu0 0.0
        %1139 = vmatpush2.msra.mxu0 0.0
        %1140 = vmatprep.subr.mxu0 0.0
        %1141 = vmatpush2.msra.mxu0 0.0
        %1142 = vmatprep.subr.mxu0 0.0
        %1143 = vmatpush2.msra.mxu0 0.0
        %1144 = vmatprep.subr.mxu0 0.0
        %1145 = vmatpush2.msra.mxu0 0.0
        %1146 = vmatprep.subr.mxu0 0.0
        %1147 = vmatpush2.msra.mxu0 0.0
        %1148 = vmatprep.subr.mxu0 0.0
        %1149 = vmatpush2.msra.mxu0 0.0
        %1150 = vmatprep.subr.mxu0 0.0
        %1151 = vmatpush2.msra.mxu0 0.0
        %1152 = vmatprep.mubr.f32.mxu0 0.0
        %1153 = vmatmul.mubr.f32.gmra.mxu0 %v1057
        %v1154 = vpop.f32.mrf.mxu0
        %v1155 = vadd.f32 %v1086, %v1154
        %v1156 = vpop.f32.mrf.mxu0
        %1157 = vmatprep.mubr.f32.mxu0 0.0
        %1158 = vmatmul.mubr.f32.gmra.mxu0 %v1058
        %v1159 = vpop.f32.mrf.mxu0
        %v1160 = vadd.f32 %v1086, %v1159
        %v1161 = vpop.f32.mrf.mxu0
        %1162 = vmatprep.mubr.f32.mxu0 0.0
        %1163 = vmatmul.mubr.f32.gmra.mxu0 %v1059
        %v1164 = vpop.f32.mrf.mxu0
        %v1165 = vadd.f32 %v1086, %v1164
        %v1166 = vpop.f32.mrf.mxu0
        %1167 = vmatprep.mubr.f32.mxu0 0.0
        %1168 = vmatmul.mubr.f32.gmra.mxu0 %v1060
        %v1169 = vpop.f32.mrf.mxu0
        %v1170 = vadd.f32 %v1086, %v1169
        %v1171 = vpop.f32.mrf.mxu0
        %1172 = vmatprep.mubr.f32.mxu0 0.0
        %1173 = vmatmul.mubr.f32.gmra.mxu0 %v1061
        %v1174 = vpop.f32.mrf.mxu0
        %v1175 = vadd.f32 %v1086, %v1174
        %v1176 = vpop.f32.mrf.mxu0
        %1177 = vmatprep.mubr.f32.mxu0 0.0
        %1178 = vmatmul.mubr.f32.gmra.mxu0 %v1062
        %v1179 = vpop.f32.mrf.mxu0
        %v1180 = vadd.f32 %v1086, %v1179
        %v1181 = vpop.f32.mrf.mxu0
        %1182 = vmatprep.mubr.f32.mxu0 0.0
        %1183 = vmatmul.mubr.f32.gmra.mxu0 %v1063
        %v1184 = vpop.f32.mrf.mxu0
        %v1185 = vadd.f32 %v1086, %v1184
        %v1186 = vpop.f32.mrf.mxu0
        %1187 = vmatprep.mubr.f32.mxu0 0.0
        %1188 = vmatmul.mubr.f32.gmra.mxu0 %v1064
        %v1189 = vpop.f32.mrf.mxu0
        %v1190 = vadd.f32 %v1086, %v1189
        %v1191 = vpop.f32.mrf.mxu0
        %1192 = vdwg.mxu0
        %1193 = vst [vmem:[%s535] sm:$0xff] %v1155
        %1194 = vst [vmem:[%s535 + $0x8] sm:$0xff] %v1160
        %1195 = vst [vmem:[%s535 + $0x10] sm:$0xff] %v1165
        %1196 = vst [vmem:[%s535 + $0x18] sm:$0xff] %v1170
        %1197 = vst [vmem:[%s535 + $0x20] sm:$0xff] %v1175
        %1198 = vst [vmem:[%s535 + $0x28] sm:$0xff] %v1180
        %1199 = vst [vmem:[%s535 + $0x30] sm:$0xff] %v1185
        %1200 = vst [vmem:[%s535 + $0x38] sm:$0xff] %v1190
        %s1201 = sand.u32 %s308, 1
        %s1202 = scalar_lea.sflag [#allocation4], %s1201
        %s1203 = sand.u32 %s308, 1
        %s1204 = smul.addr %s1203, 64
        %s1205 = scalar_lea.vmem [#allocation7], %s1204
        // Predicated region
        $region69: #{tpu_custom_call.1} parent=59 // pred_check
          %p1206 = pneg %p318
        $region70: #{tpu_custom_call.1} parent=59 // pred_check_branch
          %1208 = sbr.rel (%p1206) target = $region72
        $region71: #{tpu_custom_call.1} parent=59 // pred_region
          %s1209 = smul.u32 8, %s35
          %s1211 = ssub.s32 1024, 1024
          %1212 = vsyncadd %s1202, %s1211
          %s1213 = smul.addr %s34, 8
          %s1214 = sadd.s32 %s1209, %s1213
          %s1215 = smul.addr %s1214, 128
          %s1216 = scalar_lea.hbm %s10, %s1215
          %s1217 = sshll.u32 %s1205, 4
          %s1218 = int_to_ptr.vmem [resolvable:$true] %s1217
          %1223 = dma.vmem_to_hbm [thread:$0]  %s1218, 1024, %s1216, %s1202, 128, 128, 8
        $region72: #{tpu_custom_call.1} parent=59 // pred_fallthru
          _
      $region60: #{tpu_custom_call.1} parent=5 // pred_fallthru
        _
      %p1224 = scmp.le.s32.totalorder 2, %s25
      // Predicated region
      $region73: #{tpu_custom_call.1} parent=5 // pred_check
        %p1225 = pneg %p1224
      $region74: #{tpu_custom_call.1} parent=5 // pred_check_branch
        %1227 = sbr.rel (%p1225) target = $region76
      $region75: #{tpu_custom_call.1} parent=5 // pred_region
        %s1228 = ssub.s32 %s25, 2
        // Predicated region
        $region77: #{tpu_custom_call.1} parent=75 // pred_check
          %p1229 = pneg %p324
        $region78: #{tpu_custom_call.1} parent=75 // pred_check_branch
          %1231 = sbr.rel (%p1229) target = $region80
        $region79: #{tpu_custom_call.1} parent=75 // pred_region
          %s1232 = sand.u32 %s309, 1
          %s1233 = scalar_lea.sflag [#allocation4], %s1232
          %s1234 = sand.u32 %s309, 1
          %s1235 = smul.addr %s1234, 64
          %s1236 = scalar_lea.vmem [#allocation7], %s1235
          %1237 = dma.done %s1233, 1024
        $region80: #{tpu_custom_call.1} parent=75 // pred_fallthru
          _
      $region76: #{tpu_custom_call.1} parent=5 // pred_fallthru
        _
    $region6: #{tpu_custom_call.1} parent=1 // loop_footer
      %s29 = sadd.s32 1, %s25
    $region7: #{tpu_custom_call.1} parent=1 // loop_footer_branch
      %24 = sbr.rel target = $region3
    $region8: #{tpu_custom_call.1} parent=1 // loop_exit
      _
    %1238 = vsyncpa [#allocation3], 1
    %s1239 = scalar_lea.sflag [#allocation3], 1
    %1240 = vsyncpa %s1239, 1
    %1241 = vsyncpa [#allocation6], 1
    %s1242 = scalar_lea.sflag [#allocation6], 1
    %1243 = vsyncpa %s1242, 1
    %1244 = vsyncpa [#allocation4], 1
    %s1245 = scalar_lea.sflag [#allocation4], 1
    %1246 = vsyncpa %s1245, 1

</llo_original>
